<compile_context>
chip_gen: v7x
topology: tpu7x:2x2x1
jax: 0.10.0
libtpu: 0.0.40
codegen_flags: <defaults>
</compile_context>

<pallas_src>
import functools
import math

import numpy as np
import jax
import jax.numpy as jnp
from jax.experimental import pallas as pl
from jax.experimental.pallas import tpu as pltpu


def _round_up(x, m):
    return (x + m - 1) // m * m


def _posemb_kernel(p_ref, e_ref, aux_ref, out_ref):
    # p_ref:   [T, K]     bf16  per-group packed scalars (pos_hi | pos_lo | keep | 0-pad)
    # e_ref:   [K, 2W]    bf16  0/1 selection matrix (grid-invariant)
    # aux_ref: [2, W]     f32   row 0 = tiled freqs, row 1 = phase offsets (0 or pi/2)
    # out_ref: [T, W]     f32   lane-dense view of [T*G, emb]
    w = out_ref.shape[1]
    # MXU: expand per-row scalars across the W lanes. bf16 x bf16 -> f32 acc is
    # exact here because every operand is bf16-representable by construction.
    pe = jnp.dot(p_ref[...], e_ref[...], preferred_element_type=jnp.float32)  # [T, 2W]
    # phase = position * freq  (+ pi/2 on the cos columns)
    phase = pe[:, :w] * aux_ref[0:1, :] + aux_ref[1:2, :]
    # single transcendental per output element; keep flag zeroes padded rows
    out_ref[...] = jnp.sin(phase) * pe[:, w:]


def length_injection_sinusoidal_positional_embedding(
    positions,               # [bsz, seqlen, 2]  (forward_pos, backward_pos)
    forward_freq_weights,    # [quarter_dim]
    backward_freq_weights,   # [quarter_dim]
    *,
    padding_idx,
    freq_base=200.0,
):
    bsz, seqlen, two = positions.shape
    assert two == 2
    quarter = forward_freq_weights.shape[0]
    emb = 4 * quarter
    log_freq_base = math.log(freq_base)

    # ---------- lane-dense grouping geometry ----------
    # View output as [n_rows // G, G * emb]: W = G*emb is a multiple of 128 and >= 512.
    g_unit = 128 // math.gcd(emb, 128)
    G = g_unit
    while G * emb < 512:
        G += g_unit
    W = G * emb
    K = _round_up(5 * G, 128)        # channels: pos_hi(2G) + pos_lo(2G) + keep(G), zero pad

    n_rows = bsz * seqlen
    n_groups = pl.cdiv(n_rows, G)
    # Aim for >= ~8 grid steps (megacore sharding) while capping the block at
    # 512 group-rows (~0.25-1 MB output slab, well inside every chip's VMEM).
    T = min(512, max(16, _round_up(pl.cdiv(n_groups, 8), 16)))
    n_groups_p = _round_up(n_groups, T)
    grid = n_groups_p // T
    rows_p = n_groups_p * G

    # ---------- per-row data (read traffic ~12% of output bytes) ----------
    # Padding mask from the *original* positions dtype (exact comparison).
    keep = (positions[:, :, 0] != padding_idx).reshape(n_rows).astype(jnp.float32)
    pos = positions.reshape(n_rows, 2).astype(jnp.float32)

    pad_r = rows_p - n_rows
    pos = jnp.pad(pos, ((0, pad_r), (0, 0)))
    keep = jnp.pad(keep, (0, pad_r))

    # bf16-exact hi/lo split so the MXU expansion reproduces positions exactly.
    # TODO(synk): exact only for |position| < 2**16 (ample for sequence positions).
    pos_hi = pos.astype(jnp.bfloat16).astype(jnp.float32)
    pos_lo = pos - pos_hi

    P = jnp.concatenate(
        [pos_hi.reshape(n_groups_p, 2 * G),
         pos_lo.reshape(n_groups_p, 2 * G),
         keep.reshape(n_groups_p, G)],
        axis=1)
    P = jnp.pad(P, ((0, 0), (0, K - 5 * G))).astype(jnp.bfloat16)

    # ---------- grid-invariant operands ----------
    d = np.arange(emb)
    q = d % quarter
    sel = (d // quarter) % 2          # 0 -> forward, 1 -> backward
    is_cos = d // (2 * quarter)       # 0 -> sin half, 1 -> cos half

    c = np.arange(W)
    gc, dc = c // emb, c % emb
    row_pos = 2 * gc + (dc // quarter) % 2
    e_sel = (np.arange(2 * G)[:, None] == row_pos[None, :]).astype(np.float32)   # [2G, W]
    e_keep = (np.arange(G)[:, None] == gc[None, :]).astype(np.float32)           # [G, W]
    E = np.zeros((K, 2 * W), dtype=np.float32)
    E[0:2 * G, 0:W] = e_sel           # selects pos_hi
    E[2 * G:4 * G, 0:W] = e_sel       # selects pos_lo (accumulated -> exact position)
    E[4 * G:5 * G, W:2 * W] = e_keep  # selects keep flag
    E = jnp.asarray(E, dtype=jnp.bfloat16)   # 0/1 entries: exact in bf16

    # Frequencies hoisted out of the kernel (computed once, not once per grid step).
    freq_f = jnp.exp(forward_freq_weights.astype(jnp.float32) * -log_freq_base)
    freq_b = jnp.exp(backward_freq_weights.astype(jnp.float32) * -log_freq_base)
    freq_pat = jnp.where(jnp.asarray(sel == 0), freq_f[q], freq_b[q])             # [emb]
    off_pat = jnp.asarray(is_cos, dtype=np.float32) * np.float32(np.pi / 2)       # cos(x)=sin(x+pi/2)
    aux = jnp.stack([jnp.tile(freq_pat, G), jnp.tile(off_pat, G)]).astype(jnp.float32)  # [2, W]

    out_grouped = pl.pallas_call(
        _posemb_kernel,
        out_shape=jax.ShapeDtypeStruct((n_groups_p, W), jnp.float32),
        grid=(grid,),
        in_specs=[
            pl.BlockSpec((T, K), lambda i: (i, 0)),
            pl.BlockSpec((K, 2 * W), lambda i: (0, 0)),
            pl.BlockSpec((2, W), lambda i: (0, 0)),
        ],
        out_specs=pl.BlockSpec((T, W), lambda i: (i, 0)),
        compiler_params=pltpu.CompilerParams(dimension_semantics=("parallel",)),
    )(P, E, aux)

    out = out_grouped.reshape(rows_p, emb)[:n_rows]
    return out.reshape(bsz, seqlen, emb)


def _reference(positions, fwd_w, bwd_w, padding_idx, freq_base=200.0):
    """Pure-JAX reference mirroring the PyTorch forward."""
    bsz, seqlen, _ = positions.shape
    log_freq_base = math.log(freq_base)
    freq_weights = jnp.stack([fwd_w, bwd_w], axis=0)                    # [2, Q]
    forward_freqs = jnp.exp(freq_weights * -log_freq_base)              # [2, Q]
    out_phase = positions[..., None] * forward_freqs[None, None]        # [b, s, 2, Q]
    out_phase = out_phase.reshape(bsz, seqlen, -1)                      # [b, s, 2Q]
    output = jnp.concatenate([jnp.sin(out_phase), jnp.cos(out_phase)], axis=-1)
    mask = (positions[:, :, 0] == padding_idx)[..., None]
    return jnp.where(mask, 0.0, output)


if __name__ == "__main__":
    # Module hyperparameters (deterministic, in-script)
    embedding_dim = 32
    quarter_dim = embedding_dim // 4
    padding_idx = 1
    freq_base = 200.0

    # Parameters as in __init__: linspace(0, 1, quarter_dim)
    forward_freq_weights = jnp.linspace(0.0, 1.0, quarter_dim, dtype=jnp.float32)
    backward_freq_weights = jnp.linspace(0.0, 1.0, quarter_dim, dtype=jnp.float32)

    # Example input: [bsz, seqlen, 2] positions, some rows set to padding_idx
    bsz, seqlen = 2, 8
    key = jax.random.PRNGKey(0)
    positions = jax.random.randint(key, (bsz, seqlen, 2), 0, 20).astype(jnp.float32)
    positions = positions.at[0, 3, 0].set(float(padding_idx))
    positions = positions.at[1, 5, 0].set(float(padding_idx))

    out = length_injection_sinusoidal_positional_embedding(
        positions, forward_freq_weights, backward_freq_weights,
        padding_idx=padding_idx, freq_base=freq_base,
    )
    out = jax.block_until_ready(out)

    ref = _reference(positions, forward_freq_weights, backward_freq_weights,
                     padding_idx, freq_base)
    assert out.shape == (bsz, seqlen, embedding_dim)
    assert jnp.allclose(out, ref, atol=2e-5, rtol=2e-5)

    print("KERNEL_OK")
</pallas_src>

<mosaic_0001>
module attributes {stable_mosaic.version = 11 : i64} {
  func.func @_posemb_kernel(%arg0: i32, %arg1: memref<16x128xbf16, #tpu.memory_space<vmem>>, %arg2: memref<128x1024xbf16, #tpu.memory_space<vmem>>, %arg3: memref<2x512xf32, #tpu.memory_space<vmem>>, %arg4: memref<16x512xf32, #tpu.memory_space<vmem>>) attributes {dimension_semantics = [#tpu.dimension_semantics<parallel>], iteration_bounds = array<i64: 1>, scalar_prefetch = 0 : i64, scratch_operands = 0 : i64, tpu.core_type = #tpu.core_type<tc>, window_params = [{transform_indices = @transform_0, window_bounds = array<i64: 16, 128>}, {pipeline_mode = #tpu.pipeline_mode<synchronous>, transform_indices = @transform_1, window_bounds = array<i64: 128, 1024>}, {pipeline_mode = #tpu.pipeline_mode<synchronous>, transform_indices = @transform_2, window_bounds = array<i64: 2, 512>}, {transform_indices = @transform_3, window_bounds = array<i64: 16, 512>}]} {
    %c0 = arith.constant 0 : index
    %c0_0 = arith.constant 0 : index
    %0 = vector.load %arg1[%c0, %c0_0] : memref<16x128xbf16, #tpu.memory_space<vmem>>, vector<16x128xbf16>
    %c0_1 = arith.constant 0 : index
    %c0_2 = arith.constant 0 : index
    %1 = vector.load %arg2[%c0_1, %c0_2] : memref<128x1024xbf16, #tpu.memory_space<vmem>>, vector<128x1024xbf16>
    %cst = arith.constant dense<0.000000e+00> : vector<16x1024xf32>
    %2 = tpu.matmul %0, %1, %cst {dimension_numbers = #tpu.dot_dimension_numbers<[1], [0], [0], [1], [0, 0, 1, 1], [], []>} : vector<16x128xbf16>, vector<128x1024xbf16>, vector<16x1024xf32> -> vector<16x1024xf32>
    %3 = vector.extract_strided_slice %2 {offsets = [0, 0], sizes = [16, 512], strides = [1, 1]} : vector<16x1024xf32> to vector<16x512xf32>
    %c0_3 = arith.constant 0 : index
    %c0_4 = arith.constant 0 : index
    %4 = vector.load %arg3[%c0_3, %c0_4] : memref<2x512xf32, #tpu.memory_space<vmem>>, vector<1x512xf32>
    %5 = vector.broadcast %4 : vector<1x512xf32> to vector<16x512xf32>
    %6 = arith.mulf %3, %5 : vector<16x512xf32>
    %c1 = arith.constant 1 : index
    %c0_5 = arith.constant 0 : index
    %7 = vector.load %arg3[%c1, %c0_5] : memref<2x512xf32, #tpu.memory_space<vmem>>, vector<1x512xf32>
    %8 = vector.broadcast %7 : vector<1x512xf32> to vector<16x512xf32>
    %9 = arith.addf %6, %8 : vector<16x512xf32>
    %10 = math.sin %9 : vector<16x512xf32>
    %11 = vector.extract_strided_slice %2 {offsets = [0, 512], sizes = [16, 512], strides = [1, 1]} : vector<16x1024xf32> to vector<16x512xf32>
    %12 = arith.mulf %10, %11 : vector<16x512xf32>
    %c0_6 = arith.constant 0 : index
    %c0_7 = arith.constant 0 : index
    %13 = vector.load %arg4[%c0_6, %c0_7] : memref<16x512xf32, #tpu.memory_space<vmem>>, vector<16x512xf32>
    tpu.vector_store %arg4[%c0_6, %c0_7], %12 {strides = array<i32>} : memref<16x512xf32, #tpu.memory_space<vmem>>, vector<16x512xf32>,
    return
  }
  func.func @transform_0(%arg0: i32) -> (i32, i32) {
    %c0_i32 = arith.constant 0 : i32
    %c0_i32_0 = arith.constant 0 : i32
    return %arg0, %c0_i32 : i32, i32
  }
  func.func @transform_1(%arg0: i32) -> (i32, i32) {
    %c0_i32 = arith.constant 0 : i32
    %c0_i32_0 = arith.constant 0 : i32
    %c0_i32_1 = arith.constant 0 : i32
    return %c0_i32, %c0_i32_0 : i32, i32
  }
  func.func @transform_2(%arg0: i32) -> (i32, i32) {
    %c0_i32 = arith.constant 0 : i32
    %c0_i32_0 = arith.constant 0 : i32
    %c0_i32_1 = arith.constant 0 : i32
    return %c0_i32, %c0_i32_0 : i32, i32
  }
  func.func @transform_3(%arg0: i32) -> (i32, i32) {
    %c0_i32 = arith.constant 0 : i32
    %c0_i32_0 = arith.constant 0 : i32
    return %arg0, %c0_i32 : i32, i32
  }
}

</mosaic_0001>

<llo_original>
// kernel: tpu_custom_call.1
$region0: #{tpu_custom_call.1}
  #allocation0 [shape = 'u32[]', space=smem, size = 0x4, offset = 0x4, fixed_abs, tag = 'smem constant byte address 0x4 - core index']
  #allocation1 [shape = 'u32[144,128]{1,0:T(1,128)}', space=vmem, size = 0x12000, scoped, tag = 'internal scratch']
  %s0 = inlined_call_operand.hbm [shape: bf16[16,128], index: 0, kind: input, shape index: {}]
  %s1 = inlined_call_operand.hbm [shape: bf16[128,1024], index: 1, kind: input, shape index: {}]
  %s2 = inlined_call_operand.hbm [shape: f32[2,512], index: 2, kind: input, shape index: {}]
  %s3 = inlined_call_operand.hbm [shape: f32[16,512], index: 3, kind: output, shape index: {}]
  %s4 = sld [smem:[#allocation0]]
  $region34: #{tpu_custom_call.1} parent=0
    _
  %s6 = ssub.s32 1, %s4
  %s7 = scalar_select 0, %s6, %s4
  $region1: #{tpu_custom_call.1} parent=0
    #allocation2 [shape = 'u8[4096]{0}', space=vmem, size = 0x1000, scoped, tag = 'input window, operand 0, single buffered']
    #allocation3 [shape = 's32[1]{0}', space=sflag, size = 0x4, scoped, tag = 'scoped memory for tpu_custom_call.1']
    #allocation4 [shape = 's32[1]{0}', space=sflag, size = 0x4, scoped, tag = 'scoped memory for tpu_custom_call.1']
    #allocation5 [shape = 'u8[262144]{0}', space=vmem, size = 0x40000, scoped, tag = 'input window, operand 1, single buffered']
    #allocation6 [shape = 's32[1]{0}', space=sflag, size = 0x4, scoped, tag = 'scoped memory for tpu_custom_call.1']
    #allocation7 [shape = 'u8[4096]{0}', space=vmem, size = 0x1000, scoped, tag = 'input window, operand 2, single buffered']
    #allocation8 [shape = 'u8[32768]{0}', space=vmem, size = 0x8000, scoped, tag = 'output window, operand 0, single buffered']
    %8 = vsyncpa [#allocation3], 0
    %9 = vsyncpa [#allocation6], 0
    %10 = vsyncpa [#allocation4], 0
    // Predicated region
    $region2: #{tpu_custom_call.1} parent=1 // pred_check
      _
    $region3: #{tpu_custom_call.1} parent=1 // pred_check_branch
      %12 = sbr.rel (0) target = $region5
    $region4: #{tpu_custom_call.1} parent=1 // pred_region
      %s14 = ssub.s32 128, 128
      %15 = vsyncadd [#allocation3], %s14
      %s16 = sshll.u32 [#allocation2], 4
      %s17 = int_to_ptr.vmem [resolvable:$true] %s16
      %22 = dma.hbm_to_vmem [thread:$0]  %s0, 128, %s17, [#allocation3], 64, 64, 4
    $region5: #{tpu_custom_call.1} parent=1 // pred_fallthru
      _
    // Predicated region
    $region6: #{tpu_custom_call.1} parent=1 // pred_check
      _
    $region7: #{tpu_custom_call.1} parent=1 // pred_check_branch
      %24 = sbr.rel (0) target = $region9
    $region8: #{tpu_custom_call.1} parent=1 // pred_region
      %s26 = ssub.s32 8192, 8192
      %27 = vsyncadd [#allocation6], %s26
      %s28 = sshll.u32 [#allocation5], 4
      %s29 = int_to_ptr.vmem [resolvable:$true] %s28
      %34 = dma.hbm_to_vmem [thread:$0]  %s1, 8192, %s29, [#allocation6], 512, 512, 32
    $region9: #{tpu_custom_call.1} parent=1 // pred_fallthru
      _
    // Predicated region
    $region10: #{tpu_custom_call.1} parent=1 // pred_check
      _
    $region11: #{tpu_custom_call.1} parent=1 // pred_check_branch
      %36 = sbr.rel (0) target = $region13
    $region12: #{tpu_custom_call.1} parent=1 // pred_region
      %s38 = ssub.s32 128, 128
      %39 = vsyncadd [#allocation6], %s38
      %s41 = sshll.u32 [#allocation7], 4
      %s42 = int_to_ptr.vmem [resolvable:$true] %s41
      %44 = dma.hbm_to_vmem [thread:$0]  %s2, 128, %s42, [#allocation6]
    $region13: #{tpu_custom_call.1} parent=1 // pred_fallthru
      _
    // Predicated region
    $region14: #{tpu_custom_call.1} parent=1 // pred_check
      _
    $region15: #{tpu_custom_call.1} parent=1 // pred_check_branch
      %46 = sbr.rel (0) target = $region17
    $region16: #{tpu_custom_call.1} parent=1 // pred_region
      %47 = dma.done [#allocation3], 128
    $region17: #{tpu_custom_call.1} parent=1 // pred_fallthru
      _
    // Predicated region
    $region18: #{tpu_custom_call.1} parent=1 // pred_check
      _
    $region19: #{tpu_custom_call.1} parent=1 // pred_check_branch
      %49 = sbr.rel (0) target = $region21
    $region20: #{tpu_custom_call.1} parent=1 // pred_region
      %50 = dma.done [#allocation6], 8192
    $region21: #{tpu_custom_call.1} parent=1 // pred_fallthru
      _
    // Predicated region
    $region22: #{tpu_custom_call.1} parent=1 // pred_check
      _
    $region23: #{tpu_custom_call.1} parent=1 // pred_check_branch
      %52 = sbr.rel (0) target = $region25
    $region24: #{tpu_custom_call.1} parent=1 // pred_region
      %53 = dma.done [#allocation6], 128
    $region25: #{tpu_custom_call.1} parent=1 // pred_fallthru
      _
    %v55 = vld [vmem:[#allocation2] sm:$0xf]
    %v56 = vld [vmem:[#allocation2 + $0x4] sm:$0xf]
    %v57 = vld [vmem:[#allocation5] sm:$0xff]
    %v58 = vld [vmem:[#allocation5 + $0x8] sm:$0xff]
    %v59 = vld [vmem:[#allocation5 + $0x10] sm:$0xff]
    %v60 = vld [vmem:[#allocation5 + $0x18] sm:$0xff]
    %v61 = vld [vmem:[#allocation5 + $0x20] sm:$0xff]
    %v62 = vld [vmem:[#allocation5 + $0x28] sm:$0xff]
    %v63 = vld [vmem:[#allocation5 + $0x30] sm:$0xff]
    %v64 = vld [vmem:[#allocation5 + $0x38] sm:$0xff]
    %v65 = vld [vmem:[#allocation5 + $0x40] sm:$0xff]
    %v66 = vld [vmem:[#allocation5 + $0x48] sm:$0xff]
    %v67 = vld [vmem:[#allocation5 + $0x50] sm:$0xff]
    %v68 = vld [vmem:[#allocation5 + $0x58] sm:$0xff]
    %v69 = vld [vmem:[#allocation5 + $0x60] sm:$0xff]
    %v70 = vld [vmem:[#allocation5 + $0x68] sm:$0xff]
    %v71 = vld [vmem:[#allocation5 + $0x70] sm:$0xff]
    %v72 = vld [vmem:[#allocation5 + $0x78] sm:$0xff]
    %v73 = vld [vmem:[#allocation5 + $0x80] sm:$0xff]
    %v74 = vld [vmem:[#allocation5 + $0x88] sm:$0xff]
    %v75 = vld [vmem:[#allocation5 + $0x90] sm:$0xff]
    %v76 = vld [vmem:[#allocation5 + $0x98] sm:$0xff]
    %v77 = vld [vmem:[#allocation5 + $0xa0] sm:$0xff]
    %v78 = vld [vmem:[#allocation5 + $0xa8] sm:$0xff]
    %v79 = vld [vmem:[#allocation5 + $0xb0] sm:$0xff]
    %v80 = vld [vmem:[#allocation5 + $0xb8] sm:$0xff]
    %v81 = vld [vmem:[#allocation5 + $0xc0] sm:$0xff]
    %v82 = vld [vmem:[#allocation5 + $0xc8] sm:$0xff]
    %v83 = vld [vmem:[#allocation5 + $0xd0] sm:$0xff]
    %v84 = vld [vmem:[#allocation5 + $0xd8] sm:$0xff]
    %v85 = vld [vmem:[#allocation5 + $0xe0] sm:$0xff]
    %v86 = vld [vmem:[#allocation5 + $0xe8] sm:$0xff]
    %v87 = vld [vmem:[#allocation5 + $0xf0] sm:$0xff]
    %v88 = vld [vmem:[#allocation5 + $0xf8] sm:$0xff]
    %v89 = vld [vmem:[#allocation5 + $0x100] sm:$0xff]
    %v90 = vld [vmem:[#allocation5 + $0x108] sm:$0xff]
    %v91 = vld [vmem:[#allocation5 + $0x110] sm:$0xff]
    %v92 = vld [vmem:[#allocation5 + $0x118] sm:$0xff]
    %v93 = vld [vmem:[#allocation5 + $0x120] sm:$0xff]
    %v94 = vld [vmem:[#allocation5 + $0x128] sm:$0xff]
    %v95 = vld [vmem:[#allocation5 + $0x130] sm:$0xff]
    %v96 = vld [vmem:[#allocation5 + $0x138] sm:$0xff]
    %v97 = vld [vmem:[#allocation5 + $0x140] sm:$0xff]
    %v98 = vld [vmem:[#allocation5 + $0x148] sm:$0xff]
    %v99 = vld [vmem:[#allocation5 + $0x150] sm:$0xff]
    %v100 = vld [vmem:[#allocation5 + $0x158] sm:$0xff]
    %v101 = vld [vmem:[#allocation5 + $0x160] sm:$0xff]
    %v102 = vld [vmem:[#allocation5 + $0x168] sm:$0xff]
    %v103 = vld [vmem:[#allocation5 + $0x170] sm:$0xff]
    %v104 = vld [vmem:[#allocation5 + $0x178] sm:$0xff]
    %v105 = vld [vmem:[#allocation5 + $0x180] sm:$0xff]
    %v106 = vld [vmem:[#allocation5 + $0x188] sm:$0xff]
    %v107 = vld [vmem:[#allocation5 + $0x190] sm:$0xff]
    %v108 = vld [vmem:[#allocation5 + $0x198] sm:$0xff]
    %v109 = vld [vmem:[#allocation5 + $0x1a0] sm:$0xff]
    %v110 = vld [vmem:[#allocation5 + $0x1a8] sm:$0xff]
    %v111 = vld [vmem:[#allocation5 + $0x1b0] sm:$0xff]
    %v112 = vld [vmem:[#allocation5 + $0x1b8] sm:$0xff]
    %v113 = vld [vmem:[#allocation5 + $0x1c0] sm:$0xff]
    %v114 = vld [vmem:[#allocation5 + $0x1c8] sm:$0xff]
    %v115 = vld [vmem:[#allocation5 + $0x1d0] sm:$0xff]
    %v116 = vld [vmem:[#allocation5 + $0x1d8] sm:$0xff]
    %v117 = vld [vmem:[#allocation5 + $0x1e0] sm:$0xff]
    %v118 = vld [vmem:[#allocation5 + $0x1e8] sm:$0xff]
    %v119 = vld [vmem:[#allocation5 + $0x1f0] sm:$0xff]
    %v120 = vld [vmem:[#allocation5 + $0x1f8] sm:$0xff]
    %v123 = vunpack.c.l.b16 %v55
    %v124 = vunpack.c.l.b16 %v56
    %v125 = vpack.c.b16 %v124, %v123
    %v191 = vunpack.c.l.b16 %v57
    %v192 = vunpack.c.h.b16 %v57
    %v193 = vunpack.c.l.b16 %v58
    %v194 = vunpack.c.h.b16 %v58
    %v195 = vunpack.c.l.b16 %v59
    %v196 = vunpack.c.h.b16 %v59
    %v197 = vunpack.c.l.b16 %v60
    %v198 = vunpack.c.h.b16 %v60
    %v199 = vunpack.c.l.b16 %v61
    %v200 = vunpack.c.h.b16 %v61
    %v201 = vunpack.c.l.b16 %v62
    %v202 = vunpack.c.h.b16 %v62
    %v203 = vunpack.c.l.b16 %v63
    %v204 = vunpack.c.h.b16 %v63
    %v205 = vunpack.c.l.b16 %v64
    %v206 = vunpack.c.h.b16 %v64
    %v207 = vunpack.c.l.b16 %v65
    %v208 = vunpack.c.h.b16 %v65
    %v209 = vunpack.c.l.b16 %v66
    %v210 = vunpack.c.h.b16 %v66
    %v211 = vunpack.c.l.b16 %v67
    %v212 = vunpack.c.h.b16 %v67
    %v213 = vunpack.c.l.b16 %v68
    %v214 = vunpack.c.h.b16 %v68
    %v215 = vunpack.c.l.b16 %v69
    %v216 = vunpack.c.h.b16 %v69
    %v217 = vunpack.c.l.b16 %v70
    %v218 = vunpack.c.h.b16 %v70
    %v219 = vunpack.c.l.b16 %v71
    %v220 = vunpack.c.h.b16 %v71
    %v221 = vunpack.c.l.b16 %v72
    %v222 = vunpack.c.h.b16 %v72
    %v223 = vunpack.c.l.b16 %v73
    %v224 = vunpack.c.h.b16 %v73
    %v225 = vunpack.c.l.b16 %v74
    %v226 = vunpack.c.h.b16 %v74
    %v227 = vunpack.c.l.b16 %v75
    %v228 = vunpack.c.h.b16 %v75
    %v229 = vunpack.c.l.b16 %v76
    %v230 = vunpack.c.h.b16 %v76
    %v231 = vunpack.c.l.b16 %v77
    %v232 = vunpack.c.h.b16 %v77
    %v233 = vunpack.c.l.b16 %v78
    %v234 = vunpack.c.h.b16 %v78
    %v235 = vunpack.c.l.b16 %v79
    %v236 = vunpack.c.h.b16 %v79
    %v237 = vunpack.c.l.b16 %v80
    %v238 = vunpack.c.h.b16 %v80
    %v239 = vunpack.c.l.b16 %v81
    %v240 = vunpack.c.h.b16 %v81
    %v241 = vunpack.c.l.b16 %v82
    %v242 = vunpack.c.h.b16 %v82
    %v243 = vunpack.c.l.b16 %v83
    %v244 = vunpack.c.h.b16 %v83
    %v245 = vunpack.c.l.b16 %v84
    %v246 = vunpack.c.h.b16 %v84
    %v247 = vunpack.c.l.b16 %v85
    %v248 = vunpack.c.h.b16 %v85
    %v249 = vunpack.c.l.b16 %v86
    %v250 = vunpack.c.h.b16 %v86
    %v251 = vunpack.c.l.b16 %v87
    %v252 = vunpack.c.h.b16 %v87
    %v253 = vunpack.c.l.b16 %v88
    %v254 = vunpack.c.h.b16 %v88
    %v255 = vunpack.c.l.b16 %v89
    %v256 = vunpack.c.h.b16 %v89
    %v257 = vunpack.c.l.b16 %v90
    %v258 = vunpack.c.h.b16 %v90
    %v259 = vunpack.c.l.b16 %v91
    %v260 = vunpack.c.h.b16 %v91
    %v261 = vunpack.c.l.b16 %v92
    %v262 = vunpack.c.h.b16 %v92
    %v263 = vunpack.c.l.b16 %v93
    %v264 = vunpack.c.h.b16 %v93
    %v265 = vunpack.c.l.b16 %v94
    %v266 = vunpack.c.h.b16 %v94
    %v267 = vunpack.c.l.b16 %v95
    %v268 = vunpack.c.h.b16 %v95
    %v269 = vunpack.c.l.b16 %v96
    %v270 = vunpack.c.h.b16 %v96
    %v271 = vunpack.c.l.b16 %v97
    %v272 = vunpack.c.h.b16 %v97
    %v273 = vunpack.c.l.b16 %v98
    %v274 = vunpack.c.h.b16 %v98
    %v275 = vunpack.c.l.b16 %v99
    %v276 = vunpack.c.h.b16 %v99
    %v277 = vunpack.c.l.b16 %v100
    %v278 = vunpack.c.h.b16 %v100
    %v279 = vunpack.c.l.b16 %v101
    %v280 = vunpack.c.h.b16 %v101
    %v281 = vunpack.c.l.b16 %v102
    %v282 = vunpack.c.h.b16 %v102
    %v283 = vunpack.c.l.b16 %v103
    %v284 = vunpack.c.h.b16 %v103
    %v285 = vunpack.c.l.b16 %v104
    %v286 = vunpack.c.h.b16 %v104
    %v287 = vunpack.c.l.b16 %v105
    %v288 = vunpack.c.h.b16 %v105
    %v289 = vunpack.c.l.b16 %v106
    %v290 = vunpack.c.h.b16 %v106
    %v291 = vunpack.c.l.b16 %v107
    %v292 = vunpack.c.h.b16 %v107
    %v293 = vunpack.c.l.b16 %v108
    %v294 = vunpack.c.h.b16 %v108
    %v295 = vunpack.c.l.b16 %v109
    %v296 = vunpack.c.h.b16 %v109
    %v297 = vunpack.c.l.b16 %v110
    %v298 = vunpack.c.h.b16 %v110
    %v299 = vunpack.c.l.b16 %v111
    %v300 = vunpack.c.h.b16 %v111
    %v301 = vunpack.c.l.b16 %v112
    %v302 = vunpack.c.h.b16 %v112
    %v303 = vunpack.c.l.b16 %v113
    %v304 = vunpack.c.h.b16 %v113
    %v305 = vunpack.c.l.b16 %v114
    %v306 = vunpack.c.h.b16 %v114
    %v307 = vunpack.c.l.b16 %v115
    %v308 = vunpack.c.h.b16 %v115
    %v309 = vunpack.c.l.b16 %v116
    %v310 = vunpack.c.h.b16 %v116
    %v311 = vunpack.c.l.b16 %v117
    %v312 = vunpack.c.h.b16 %v117
    %v313 = vunpack.c.l.b16 %v118
    %v314 = vunpack.c.h.b16 %v118
    %v315 = vunpack.c.l.b16 %v119
    %v316 = vunpack.c.h.b16 %v119
    %v317 = vunpack.c.l.b16 %v120
    %v318 = vunpack.c.h.b16 %v120
    %v319 = vpack.c.b16 %v199, %v191
    %v320 = vpack.c.b16 %v200, %v192
    %v321 = vpack.c.b16 %v201, %v193
    %v322 = vpack.c.b16 %v202, %v194
    %v323 = vpack.c.b16 %v203, %v195
    %v324 = vpack.c.b16 %v204, %v196
    %v325 = vpack.c.b16 %v205, %v197
    %v326 = vpack.c.b16 %v206, %v198
    %v327 = vpack.c.b16 %v215, %v207
    %v328 = vpack.c.b16 %v216, %v208
    %v329 = vpack.c.b16 %v217, %v209
    %v330 = vpack.c.b16 %v218, %v210
    %v331 = vpack.c.b16 %v219, %v211
    %v332 = vpack.c.b16 %v220, %v212
    %v333 = vpack.c.b16 %v221, %v213
    %v334 = vpack.c.b16 %v222, %v214
    %v335 = vpack.c.b16 %v231, %v223
    %v336 = vpack.c.b16 %v232, %v224
    %v337 = vpack.c.b16 %v233, %v225
    %v338 = vpack.c.b16 %v234, %v226
    %v339 = vpack.c.b16 %v235, %v227
    %v340 = vpack.c.b16 %v236, %v228
    %v341 = vpack.c.b16 %v237, %v229
    %v342 = vpack.c.b16 %v238, %v230
    %v343 = vpack.c.b16 %v247, %v239
    %v344 = vpack.c.b16 %v248, %v240
    %v345 = vpack.c.b16 %v249, %v241
    %v346 = vpack.c.b16 %v250, %v242
    %v347 = vpack.c.b16 %v251, %v243
    %v348 = vpack.c.b16 %v252, %v244
    %v349 = vpack.c.b16 %v253, %v245
    %v350 = vpack.c.b16 %v254, %v246
    %v351 = vpack.c.b16 %v263, %v255
    %v352 = vpack.c.b16 %v264, %v256
    %v353 = vpack.c.b16 %v265, %v257
    %v354 = vpack.c.b16 %v266, %v258
    %v355 = vpack.c.b16 %v267, %v259
    %v356 = vpack.c.b16 %v268, %v260
    %v357 = vpack.c.b16 %v269, %v261
    %v358 = vpack.c.b16 %v270, %v262
    %v359 = vpack.c.b16 %v279, %v271
    %v360 = vpack.c.b16 %v280, %v272
    %v361 = vpack.c.b16 %v281, %v273
    %v362 = vpack.c.b16 %v282, %v274
    %v363 = vpack.c.b16 %v283, %v275
    %v364 = vpack.c.b16 %v284, %v276
    %v365 = vpack.c.b16 %v285, %v277
    %v366 = vpack.c.b16 %v286, %v278
    %v367 = vpack.c.b16 %v295, %v287
    %v368 = vpack.c.b16 %v296, %v288
    %v369 = vpack.c.b16 %v297, %v289
    %v370 = vpack.c.b16 %v298, %v290
    %v371 = vpack.c.b16 %v299, %v291
    %v372 = vpack.c.b16 %v300, %v292
    %v373 = vpack.c.b16 %v301, %v293
    %v374 = vpack.c.b16 %v302, %v294
    %v375 = vpack.c.b16 %v311, %v303
    %v376 = vpack.c.b16 %v312, %v304
    %v377 = vpack.c.b16 %v313, %v305
    %v378 = vpack.c.b16 %v314, %v306
    %v379 = vpack.c.b16 %v315, %v307
    %v380 = vpack.c.b16 %v316, %v308
    %v381 = vpack.c.b16 %v317, %v309
    %v382 = vpack.c.b16 %v318, %v310
    %447 = vmatprep.subr.bf16.mxu0 %v320
    %448 = vmatpush1.bf16.msra.mxu0 %v319
    %449 = vmatprep.subr.bf16.mxu0 %v328
    %450 = vmatpush1.bf16.msra.mxu0 %v327
    %451 = vmatprep.subr.bf16.mxu0 %v336
    %452 = vmatpush1.bf16.msra.mxu0 %v335
    %453 = vmatprep.subr.bf16.mxu0 %v344
    %454 = vmatpush1.bf16.msra.mxu0 %v343
    %455 = vmatprep.subr.bf16.mxu0 %v352
    %456 = vmatpush1.bf16.msra.mxu0 %v351
    %457 = vmatprep.subr.bf16.mxu0 %v360
    %458 = vmatpush1.bf16.msra.mxu0 %v359
    %459 = vmatprep.subr.bf16.mxu0 %v368
    %460 = vmatpush1.bf16.msra.mxu0 %v367
    %461 = vmatprep.subr.bf16.mxu0 %v376
    %462 = vmatpush1.bf16.msra.mxu0 %v375
    %463 = vmatprep.subr.bf16.mxu0 0
    %464 = vmatpush1.bf16.msra.mxu0 0
    %465 = vmatprep.subr.bf16.mxu0 0
    %466 = vmatpush1.bf16.msra.mxu0 0
    %467 = vmatprep.subr.bf16.mxu0 0
    %468 = vmatpush1.bf16.msra.mxu0 0
    %469 = vmatprep.subr.bf16.mxu0 0
    %470 = vmatpush1.bf16.msra.mxu0 0
    %471 = vmatprep.subr.bf16.mxu0 0
    %472 = vmatpush1.bf16.msra.mxu0 0
    %473 = vmatprep.subr.bf16.mxu0 0
    %474 = vmatpush1.bf16.msra.mxu0 0
    %475 = vmatprep.subr.bf16.mxu0 0
    %476 = vmatpush1.bf16.msra.mxu0 0
    %477 = vmatprep.subr.bf16.mxu0 0
    %478 = vmatpush1.bf16.msra.mxu0 0
    %479 = vmatprep.mubr.bf16.mxu0 0
    %480 = vmatmul.mubr.bf16.gmra.mrb[0].mxu0 %v125
    %v481 = vpop.f32.mrb[0].mxu0
    %v482 = vadd.f32 0.0, %v481
    %v483 = vpop.f32.mrb[0].mxu0
    %v484 = vadd.f32 0.0, %v483
    %v485 = vpop.f32.mrb[0].mxu0
    %v486 = vadd.f32 0.0, %v485
    %v487 = vpop.f32.mrb[0].mxu0
    %v488 = vadd.f32 0.0, %v487
    %489 = vdwg.mxu0
    %490 = vmatprep.subr.bf16.mxu0 %v322
    %491 = vmatpush1.bf16.msra.mxu0 %v321
    %492 = vmatprep.subr.bf16.mxu0 %v330
    %493 = vmatpush1.bf16.msra.mxu0 %v329
    %494 = vmatprep.subr.bf16.mxu0 %v338
    %495 = vmatpush1.bf16.msra.mxu0 %v337
    %496 = vmatprep.subr.bf16.mxu0 %v346
    %497 = vmatpush1.bf16.msra.mxu0 %v345
    %498 = vmatprep.subr.bf16.mxu0 %v354
    %499 = vmatpush1.bf16.msra.mxu0 %v353
    %500 = vmatprep.subr.bf16.mxu0 %v362
    %501 = vmatpush1.bf16.msra.mxu0 %v361
    %502 = vmatprep.subr.bf16.mxu0 %v370
    %503 = vmatpush1.bf16.msra.mxu0 %v369
    %504 = vmatprep.subr.bf16.mxu0 %v378
    %505 = vmatpush1.bf16.msra.mxu0 %v377
    %506 = vmatprep.subr.bf16.mxu0 0
    %507 = vmatpush1.bf16.msra.mxu0 0
    %508 = vmatprep.subr.bf16.mxu0 0
    %509 = vmatpush1.bf16.msra.mxu0 0
    %510 = vmatprep.subr.bf16.mxu0 0
    %511 = vmatpush1.bf16.msra.mxu0 0
    %512 = vmatprep.subr.bf16.mxu0 0
    %513 = vmatpush1.bf16.msra.mxu0 0
    %514 = vmatprep.subr.bf16.mxu0 0
    %515 = vmatpush1.bf16.msra.mxu0 0
    %516 = vmatprep.subr.bf16.mxu0 0
    %517 = vmatpush1.bf16.msra.mxu0 0
    %518 = vmatprep.subr.bf16.mxu0 0
    %519 = vmatpush1.bf16.msra.mxu0 0
    %520 = vmatprep.subr.bf16.mxu0 0
    %521 = vmatpush1.bf16.msra.mxu0 0
    %522 = vmatprep.mubr.bf16.mxu0 0
    %523 = vmatmul.mubr.bf16.gmra.mrb[0].mxu0 %v125
    %v524 = vpop.f32.mrb[0].mxu0
    %v525 = vadd.f32 0.0, %v524
    %v526 = vpop.f32.mrb[0].mxu0
    %v527 = vadd.f32 0.0, %v526
    %v528 = vpop.f32.mrb[0].mxu0
    %v529 = vadd.f32 0.0, %v528
    %v530 = vpop.f32.mrb[0].mxu0
    %v531 = vadd.f32 0.0, %v530
    %532 = vdwg.mxu0
    %533 = vmatprep.subr.bf16.mxu0 %v324
    %534 = vmatpush1.bf16.msra.mxu0 %v323
    %535 = vmatprep.subr.bf16.mxu0 %v332
    %536 = vmatpush1.bf16.msra.mxu0 %v331
    %537 = vmatprep.subr.bf16.mxu0 %v340
    %538 = vmatpush1.bf16.msra.mxu0 %v339
    %539 = vmatprep.subr.bf16.mxu0 %v348
    %540 = vmatpush1.bf16.msra.mxu0 %v347
    %541 = vmatprep.subr.bf16.mxu0 %v356
    %542 = vmatpush1.bf16.msra.mxu0 %v355
    %543 = vmatprep.subr.bf16.mxu0 %v364
    %544 = vmatpush1.bf16.msra.mxu0 %v363
    %545 = vmatprep.subr.bf16.mxu0 %v372
    %546 = vmatpush1.bf16.msra.mxu0 %v371
    %547 = vmatprep.subr.bf16.mxu0 %v380
    %548 = vmatpush1.bf16.msra.mxu0 %v379
    %549 = vmatprep.subr.bf16.mxu0 0
    %550 = vmatpush1.bf16.msra.mxu0 0
    %551 = vmatprep.subr.bf16.mxu0 0
    %552 = vmatpush1.bf16.msra.mxu0 0
    %553 = vmatprep.subr.bf16.mxu0 0
    %554 = vmatpush1.bf16.msra.mxu0 0
    %555 = vmatprep.subr.bf16.mxu0 0
    %556 = vmatpush1.bf16.msra.mxu0 0
    %557 = vmatprep.subr.bf16.mxu0 0
    %558 = vmatpush1.bf16.msra.mxu0 0
    %559 = vmatprep.subr.bf16.mxu0 0
    %560 = vmatpush1.bf16.msra.mxu0 0
    %561 = vmatprep.subr.bf16.mxu0 0
    %562 = vmatpush1.bf16.msra.mxu0 0
    %563 = vmatprep.subr.bf16.mxu0 0
    %564 = vmatpush1.bf16.msra.mxu0 0
    %565 = vmatprep.mubr.bf16.mxu0 0
    %566 = vmatmul.mubr.bf16.gmra.mrb[0].mxu0 %v125
    %v567 = vpop.f32.mrb[0].mxu0
    %v568 = vadd.f32 0.0, %v567
    %v569 = vpop.f32.mrb[0].mxu0
    %v570 = vadd.f32 0.0, %v569
    %v571 = vpop.f32.mrb[0].mxu0
    %v572 = vadd.f32 0.0, %v571
    %v573 = vpop.f32.mrb[0].mxu0
    %v574 = vadd.f32 0.0, %v573
    %575 = vdwg.mxu0
    %576 = vmatprep.subr.bf16.mxu0 %v326
    %577 = vmatpush1.bf16.msra.mxu0 %v325
    %578 = vmatprep.subr.bf16.mxu0 %v334
    %579 = vmatpush1.bf16.msra.mxu0 %v333
    %580 = vmatprep.subr.bf16.mxu0 %v342
    %581 = vmatpush1.bf16.msra.mxu0 %v341
    %582 = vmatprep.subr.bf16.mxu0 %v350
    %583 = vmatpush1.bf16.msra.mxu0 %v349
    %584 = vmatprep.subr.bf16.mxu0 %v358
    %585 = vmatpush1.bf16.msra.mxu0 %v357
    %586 = vmatprep.subr.bf16.mxu0 %v366
    %587 = vmatpush1.bf16.msra.mxu0 %v365
    %588 = vmatprep.subr.bf16.mxu0 %v374
    %589 = vmatpush1.bf16.msra.mxu0 %v373
    %590 = vmatprep.subr.bf16.mxu0 %v382
    %591 = vmatpush1.bf16.msra.mxu0 %v381
    %592 = vmatprep.subr.bf16.mxu0 0
    %593 = vmatpush1.bf16.msra.mxu0 0
    %594 = vmatprep.subr.bf16.mxu0 0
    %595 = vmatpush1.bf16.msra.mxu0 0
    %596 = vmatprep.subr.bf16.mxu0 0
    %597 = vmatpush1.bf16.msra.mxu0 0
    %598 = vmatprep.subr.bf16.mxu0 0
    %599 = vmatpush1.bf16.msra.mxu0 0
    %600 = vmatprep.subr.bf16.mxu0 0
    %601 = vmatpush1.bf16.msra.mxu0 0
    %602 = vmatprep.subr.bf16.mxu0 0
    %603 = vmatpush1.bf16.msra.mxu0 0
    %604 = vmatprep.subr.bf16.mxu0 0
    %605 = vmatpush1.bf16.msra.mxu0 0
    %606 = vmatprep.subr.bf16.mxu0 0
    %607 = vmatpush1.bf16.msra.mxu0 0
    %608 = vmatprep.mubr.bf16.mxu0 0
    %609 = vmatmul.mubr.bf16.gmra.mrb[0].mxu0 %v125
    %v610 = vpop.f32.mrb[0].mxu0
    %v611 = vadd.f32 0.0, %v610
    %v612 = vpop.f32.mrb[0].mxu0
    %v613 = vadd.f32 0.0, %v612
    %v614 = vpop.f32.mrb[0].mxu0
    %v615 = vadd.f32 0.0, %v614
    %v616 = vpop.f32.mrb[0].mxu0
    %v617 = vadd.f32 0.0, %v616
    %618 = vdwg.mxu0
    %v619 = vld [vmem:[#allocation7] ss:$2 sm:$0xf]
    %v621 = vlaneseq
    %v622 = vshrl.u32 %v621, 7
    %v623 = vsub.s32 0, %v622
    %v624 = vrot.slane %v619, %v623
    %v625 = vlaneseq
    %v626 = vshrl.u32 %v625, 7
    %v627 = vsub.s32 1, %v626
    %v628 = vrot.slane %v619, %v627
    %v629 = vlaneseq
    %v630 = vshrl.u32 %v629, 7
    %v631 = vsub.s32 2, %v630
    %v632 = vrot.slane %v619, %v631
    %v633 = vlaneseq
    %v634 = vshrl.u32 %v633, 7
    %v635 = vsub.s32 3, %v634
    %v636 = vrot.slane %v619, %v635
    %v641 = vmul.f32 %v482, %v624
    %v642 = vmul.f32 %v484, %v628
    %v643 = vmul.f32 %v525, %v632
    %v644 = vmul.f32 %v527, %v636
    %v645 = vmul.f32 %v486, %v624
    %v646 = vmul.f32 %v488, %v628
    %v647 = vmul.f32 %v529, %v632
    %v648 = vmul.f32 %v531, %v636
    %s649 = scalar_lea.vmem [#allocation7], 1
    %v650 = vld [vmem:[%s649] ss:$2 sm:$0xf]
    %v652 = vlaneseq
    %v653 = vshrl.u32 %v652, 7
    %v654 = vsub.s32 0, %v653
    %v655 = vrot.slane %v650, %v654
    %v656 = vlaneseq
    %v657 = vshrl.u32 %v656, 7
    %v658 = vsub.s32 1, %v657
    %v659 = vrot.slane %v650, %v658
    %v660 = vlaneseq
    %v661 = vshrl.u32 %v660, 7
    %v662 = vsub.s32 2, %v661
    %v663 = vrot.slane %v650, %v662
    %v664 = vlaneseq
    %v665 = vshrl.u32 %v664, 7
    %v666 = vsub.s32 3, %v665
    %v667 = vrot.slane %v650, %v666
    %v672 = vadd.f32 %v641, %v655
    %v673 = vadd.f32 %v642, %v659
    %v674 = vadd.f32 %v643, %v663
    %v675 = vadd.f32 %v644, %v667
    %v676 = vadd.f32 %v645, %v655
    %v677 = vadd.f32 %v646, %v659
    %v678 = vadd.f32 %v647, %v663
    %v679 = vadd.f32 %v648, %v667
    %v680 = vand.u32 2147483647, %v672
    %vm681 = vcmp.le.f32.partialorder %v680, 0.7853982
    %vm682 = vcmp.lt.s32.totalorder %v672, 0
    %v683 = vand.u32 %v672, 2139095040
    %v684 = vshrl.u32 %v683, 23
    %v685 = vsub.s32 %v684, 127
    %v686 = vand.u32 2147483647, %v672
    %v687 = vand.u32 %v686, 8388607
    %v688 = vor.u32 %v687, 8388608
    %v689 = vsub.s32 0, %v688
    %v690 = vadd.s32 %v685, 1
    %vm691 = vcmp.gt.s32.totalorder %v690, 0
    %v692 = vsel %vm691, %v690, 0
    %v693 = vshrl.u32 %v692, 5
    %v694 = vand.u32 %v692, 31
    %v695 = vsub.s32 32, %v694
    %v696 = vshrl.u32 683565275, %v695
    %v697 = vshll.u32 683565275, %v694
    %v698 = vshrl.u32 2475754826, %v695
    %v699 = vor.u32 %v697, %v698
    %v700 = vshll.u32 2475754826, %v694
    %v701 = vshrl.u32 2131351028, %v695
    %v702 = vor.u32 %v700, %v701
    %v703 = vshll.u32 2131351028, %v694
    %v704 = vshrl.u32 2102212464, %v695
    %v705 = vor.u32 %v703, %v704
    %v706 = vshll.u32 2102212464, %v694
    %v707 = vshrl.u32 920167782, %v695
    %v708 = vor.u32 %v706, %v707
    %v709 = vshll.u32 920167782, %v694
    %v710 = vshrl.u32 1326507024, %v695
    %v711 = vor.u32 %v709, %v710
    %vm712 = vcmp.lt.s32.totalorder %v693, 1
    %vm713 = vcmp.lt.s32.totalorder %v693, 2
    %vm714 = vcmp.lt.s32.totalorder %v693, 3
    %vm715 = vcmp.lt.s32.totalorder %v693, 4
    %v716 = vsel %vm712, %v696, %v699
    %v717 = vsel %vm715, %v705, 2102212464
    %v718 = vsel %vm714, %v702, %v717
    %v719 = vsel %vm713, %v716, %v718
    %v720 = vsel %vm712, %v699, %v702
    %v721 = vsel %vm715, %v708, 920167782
    %v722 = vsel %vm714, %v705, %v721
    %v723 = vsel %vm713, %v720, %v722
    %v724 = vsel %vm712, %v702, %v705
    %v725 = vsel %vm715, %v711, 1326507024
    %v726 = vsel %vm714, %v708, %v725
    %v727 = vsel %vm713, %v724, %v726
    %v728 = vshll.u32 %v688, 8
    %v729 = vmul.u32.u64.compose %v728, %v727
    %v730 = vextract.low.u32 %v729
    %v731 = vextract.high.u32 %v729
    %v732 = vmul.u32.u64.compose %v728, %v723
    %v733 = vextract.low.u32 %v732
    %v734 = vextract.high.u32 %v732
    %v735 = vmul.u32 %v728, %v719
    %v736 = vadd.s32 %v731, %v733
    %vm737 = vc.u32 %v731, %v733
    %v738 = vadd.s32 %v734, 1
    %v739 = vsel %vm737, %v738, %v734
    %v740 = vadd.s32 %v735, %v739
    %v741 = vadd.s32 %v740, 536870912
    %v742 = vshrl.u32 %v741, 30
    %v743 = vshll.u32 %v742, 30
    %v744 = vsub.s32 %v740, %v743
    %vm745 = vcmp.lt.s32.totalorder %v744, 0
    %v746 = vsub.s32 0, %v744
    %v747 = vsel %vm745, %v746, %v744
    %v748 = vclz %v747
    %v749 = vsub.s32 %v748, 2
    %vm750 = vcmp.gt.s32.totalorder 0, %v749
    %v751 = vsel %vm750, 0, %v749
    %v752 = vsub.s32 32, %v751
    %v753 = vshll.u32 %v744, %v751
    %v754 = vshrl.u32 %v736, %v752
    %v755 = vor.u32 %v753, %v754
    %v756 = vsub.s32 4294967266, %v751
    %v757 = vadd.s32 %v756, 127
    %v758 = vshll.u32 %v757, 23
    %v759 = vor.u32 4788187, %v758
    %v760 = vand.u32 2147483647, %v759
    %v762 = vcvt.s32.f32 %v755
    %v763 = vmul.f32 %v762, %v760
    %v764 = vxor.u32 %v763, 2147483648
    %v765 = vsel %vm682, %v764, %v763
    %v766 = vsub.s32 4, %v742
    %v767 = vsel %vm682, %v766, %v742
    %v768 = vsel %vm681, %v672, %v765
    %v769 = vsel %vm681, 0, %v767
    %v770 = vcosq.f32.pop %v768
    %v771 = vsinq.f32.pop %v768
    %vm772 = vweird.f32 %v672
    %v773 = vadd.s32 %v769, 3
    %v774 = vand.u32 %v773, 3
    %vm775 = vcmp.lt.s32.totalorder %v774, 2
    %vm776 = vcmp.eq.s32.totalorder %v774, 0
    %v777 = vxor.u32 %v771, 2147483648
    %v778 = vsel %vm776, %v770, %v777
    %vm779 = vcmp.eq.s32.totalorder %v774, 2
    %v780 = vxor.u32 %v770, 2147483648
    %v781 = vsel %vm779, %v780, %v771
    %v782 = vsel %vm775, %v778, %v781
    %v783 = vsel %vm772, nan, %v782
    %v784 = vand.u32 2147483647, %v673
    %vm785 = vcmp.le.f32.partialorder %v784, 0.7853982
    %vm786 = vcmp.lt.s32.totalorder %v673, 0
    %v787 = vand.u32 %v673, 2139095040
    %v788 = vshrl.u32 %v787, 23
    %v789 = vsub.s32 %v788, 127
    %v790 = vand.u32 2147483647, %v673
    %v791 = vand.u32 %v790, 8388607
    %v792 = vor.u32 %v791, 8388608
    %v793 = vsub.s32 0, %v792
    %v794 = vadd.s32 %v789, 1
    %vm795 = vcmp.gt.s32.totalorder %v794, 0
    %v796 = vsel %vm795, %v794, 0
    %v797 = vshrl.u32 %v796, 5
    %v798 = vand.u32 %v796, 31
    %v799 = vsub.s32 32, %v798
    %v800 = vshrl.u32 683565275, %v799
    %v801 = vshll.u32 683565275, %v798
    %v802 = vshrl.u32 2475754826, %v799
    %v803 = vor.u32 %v801, %v802
    %v804 = vshll.u32 2475754826, %v798
    %v805 = vshrl.u32 2131351028, %v799
    %v806 = vor.u32 %v804, %v805
    %v807 = vshll.u32 2131351028, %v798
    %v808 = vshrl.u32 2102212464, %v799
    %v809 = vor.u32 %v807, %v808
    %v810 = vshll.u32 2102212464, %v798
    %v811 = vshrl.u32 920167782, %v799
    %v812 = vor.u32 %v810, %v811
    %v813 = vshll.u32 920167782, %v798
    %v814 = vshrl.u32 1326507024, %v799
    %v815 = vor.u32 %v813, %v814
    %vm816 = vcmp.lt.s32.totalorder %v797, 1
    %vm817 = vcmp.lt.s32.totalorder %v797, 2
    %vm818 = vcmp.lt.s32.totalorder %v797, 3
    %vm819 = vcmp.lt.s32.totalorder %v797, 4
    %v820 = vsel %vm816, %v800, %v803
    %v821 = vsel %vm819, %v809, 2102212464
    %v822 = vsel %vm818, %v806, %v821
    %v823 = vsel %vm817, %v820, %v822
    %v824 = vsel %vm816, %v803, %v806
    %v825 = vsel %vm819, %v812, 920167782
    %v826 = vsel %vm818, %v809, %v825
    %v827 = vsel %vm817, %v824, %v826
    %v828 = vsel %vm816, %v806, %v809
    %v829 = vsel %vm819, %v815, 1326507024
    %v830 = vsel %vm818, %v812, %v829
    %v831 = vsel %vm817, %v828, %v830
    %v832 = vshll.u32 %v792, 8
    %v833 = vmul.u32.u64.compose %v832, %v831
    %v834 = vextract.low.u32 %v833
    %v835 = vextract.high.u32 %v833
    %v836 = vmul.u32.u64.compose %v832, %v827
    %v837 = vextract.low.u32 %v836
    %v838 = vextract.high.u32 %v836
    %v839 = vmul.u32 %v832, %v823
    %v840 = vadd.s32 %v835, %v837
    %vm841 = vc.u32 %v835, %v837
    %v842 = vadd.s32 %v838, 1
    %v843 = vsel %vm841, %v842, %v838
    %v844 = vadd.s32 %v839, %v843
    %v845 = vadd.s32 %v844, 536870912
    %v846 = vshrl.u32 %v845, 30
    %v847 = vshll.u32 %v846, 30
    %v848 = vsub.s32 %v844, %v847
    %vm849 = vcmp.lt.s32.totalorder %v848, 0
    %v850 = vsub.s32 0, %v848
    %v851 = vsel %vm849, %v850, %v848
    %v852 = vclz %v851
    %v853 = vsub.s32 %v852, 2
    %vm854 = vcmp.gt.s32.totalorder 0, %v853
    %v855 = vsel %vm854, 0, %v853
    %v856 = vsub.s32 32, %v855
    %v857 = vshll.u32 %v848, %v855
    %v858 = vshrl.u32 %v840, %v856
    %v859 = vor.u32 %v857, %v858
    %v860 = vsub.s32 4294967266, %v855
    %v861 = vadd.s32 %v860, 127
    %v862 = vshll.u32 %v861, 23
    %v863 = vor.u32 4788187, %v862
    %v864 = vand.u32 2147483647, %v863
    %v866 = vcvt.s32.f32 %v859
    %v867 = vmul.f32 %v866, %v864
    %v868 = vxor.u32 %v867, 2147483648
    %v869 = vsel %vm786, %v868, %v867
    %v870 = vsub.s32 4, %v846
    %v871 = vsel %vm786, %v870, %v846
    %v872 = vsel %vm785, %v673, %v869
    %v873 = vsel %vm785, 0, %v871
    %v874 = vcosq.f32.pop %v872
    %v875 = vsinq.f32.pop %v872
    %vm876 = vweird.f32 %v673
    %v877 = vadd.s32 %v873, 3
    %v878 = vand.u32 %v877, 3
    %vm879 = vcmp.lt.s32.totalorder %v878, 2
    %vm880 = vcmp.eq.s32.totalorder %v878, 0
    %v881 = vxor.u32 %v875, 2147483648
    %v882 = vsel %vm880, %v874, %v881
    %vm883 = vcmp.eq.s32.totalorder %v878, 2
    %v884 = vxor.u32 %v874, 2147483648
    %v885 = vsel %vm883, %v884, %v875
    %v886 = vsel %vm879, %v882, %v885
    %v887 = vsel %vm876, nan, %v886
    %v888 = vand.u32 2147483647, %v674
    %vm889 = vcmp.le.f32.partialorder %v888, 0.7853982
    %vm890 = vcmp.lt.s32.totalorder %v674, 0
    %v891 = vand.u32 %v674, 2139095040
    %v892 = vshrl.u32 %v891, 23
    %v893 = vsub.s32 %v892, 127
    %v894 = vand.u32 2147483647, %v674
    %v895 = vand.u32 %v894, 8388607
    %v896 = vor.u32 %v895, 8388608
    %v897 = vsub.s32 0, %v896
    %v898 = vadd.s32 %v893, 1
    %vm899 = vcmp.gt.s32.totalorder %v898, 0
    %v900 = vsel %vm899, %v898, 0
    %v901 = vshrl.u32 %v900, 5
    %v902 = vand.u32 %v900, 31
    %v903 = vsub.s32 32, %v902
    %v904 = vshrl.u32 683565275, %v903
    %v905 = vshll.u32 683565275, %v902
    %v906 = vshrl.u32 2475754826, %v903
    %v907 = vor.u32 %v905, %v906
    %v908 = vshll.u32 2475754826, %v902
    %v909 = vshrl.u32 2131351028, %v903
    %v910 = vor.u32 %v908, %v909
    %v911 = vshll.u32 2131351028, %v902
    %v912 = vshrl.u32 2102212464, %v903
    %v913 = vor.u32 %v911, %v912
    %v914 = vshll.u32 2102212464, %v902
    %v915 = vshrl.u32 920167782, %v903
    %v916 = vor.u32 %v914, %v915
    %v917 = vshll.u32 920167782, %v902
    %v918 = vshrl.u32 1326507024, %v903
    %v919 = vor.u32 %v917, %v918
    %vm920 = vcmp.lt.s32.totalorder %v901, 1
    %vm921 = vcmp.lt.s32.totalorder %v901, 2
    %vm922 = vcmp.lt.s32.totalorder %v901, 3
    %vm923 = vcmp.lt.s32.totalorder %v901, 4
    %v924 = vsel %vm920, %v904, %v907
    %v925 = vsel %vm923, %v913, 2102212464
    %v926 = vsel %vm922, %v910, %v925
    %v927 = vsel %vm921, %v924, %v926
    %v928 = vsel %vm920, %v907, %v910
    %v929 = vsel %vm923, %v916, 920167782
    %v930 = vsel %vm922, %v913, %v929
    %v931 = vsel %vm921, %v928, %v930
    %v932 = vsel %vm920, %v910, %v913
    %v933 = vsel %vm923, %v919, 1326507024
    %v934 = vsel %vm922, %v916, %v933
    %v935 = vsel %vm921, %v932, %v934
    %v936 = vshll.u32 %v896, 8
    %v937 = vmul.u32.u64.compose %v936, %v935
    %v938 = vextract.low.u32 %v937
    %v939 = vextract.high.u32 %v937
    %v940 = vmul.u32.u64.compose %v936, %v931
    %v941 = vextract.low.u32 %v940
    %v942 = vextract.high.u32 %v940
    %v943 = vmul.u32 %v936, %v927
    %v944 = vadd.s32 %v939, %v941
    %vm945 = vc.u32 %v939, %v941
    %v946 = vadd.s32 %v942, 1
    %v947 = vsel %vm945, %v946, %v942
    %v948 = vadd.s32 %v943, %v947
    %v949 = vadd.s32 %v948, 536870912
    %v950 = vshrl.u32 %v949, 30
    %v951 = vshll.u32 %v950, 30
    %v952 = vsub.s32 %v948, %v951
    %vm953 = vcmp.lt.s32.totalorder %v952, 0
    %v954 = vsub.s32 0, %v952
    %v955 = vsel %vm953, %v954, %v952
    %v956 = vclz %v955
    %v957 = vsub.s32 %v956, 2
    %vm958 = vcmp.gt.s32.totalorder 0, %v957
    %v959 = vsel %vm958, 0, %v957
    %v960 = vsub.s32 32, %v959
    %v961 = vshll.u32 %v952, %v959
    %v962 = vshrl.u32 %v944, %v960
    %v963 = vor.u32 %v961, %v962
    %v964 = vsub.s32 4294967266, %v959
    %v965 = vadd.s32 %v964, 127
    %v966 = vshll.u32 %v965, 23
    %v967 = vor.u32 4788187, %v966
    %v968 = vand.u32 2147483647, %v967
    %v970 = vcvt.s32.f32 %v963
    %v971 = vmul.f32 %v970, %v968
    %v972 = vxor.u32 %v971, 2147483648
    %v973 = vsel %vm890, %v972, %v971
    %v974 = vsub.s32 4, %v950
    %v975 = vsel %vm890, %v974, %v950
    %v976 = vsel %vm889, %v674, %v973
    %v977 = vsel %vm889, 0, %v975
    %v978 = vcosq.f32.pop %v976
    %v979 = vsinq.f32.pop %v976
    %vm980 = vweird.f32 %v674
    %v981 = vadd.s32 %v977, 3
    %v982 = vand.u32 %v981, 3
    %vm983 = vcmp.lt.s32.totalorder %v982, 2
    %vm984 = vcmp.eq.s32.totalorder %v982, 0
    %v985 = vxor.u32 %v979, 2147483648
    %v986 = vsel %vm984, %v978, %v985
    %vm987 = vcmp.eq.s32.totalorder %v982, 2
    %v988 = vxor.u32 %v978, 2147483648
    %v989 = vsel %vm987, %v988, %v979
    %v990 = vsel %vm983, %v986, %v989
    %v991 = vsel %vm980, nan, %v990
    %v992 = vand.u32 2147483647, %v675
    %vm993 = vcmp.le.f32.partialorder %v992, 0.7853982
    %vm994 = vcmp.lt.s32.totalorder %v675, 0
    %v995 = vand.u32 %v675, 2139095040
    %v996 = vshrl.u32 %v995, 23
    %v997 = vsub.s32 %v996, 127
    %v998 = vand.u32 2147483647, %v675
    %v999 = vand.u32 %v998, 8388607
    %v1000 = vor.u32 %v999, 8388608
    %v1001 = vsub.s32 0, %v1000
    %v1002 = vadd.s32 %v997, 1
    %vm1003 = vcmp.gt.s32.totalorder %v1002, 0
    %v1004 = vsel %vm1003, %v1002, 0
    %v1005 = vshrl.u32 %v1004, 5
    %v1006 = vand.u32 %v1004, 31
    %v1007 = vsub.s32 32, %v1006
    %v1008 = vshrl.u32 683565275, %v1007
    %v1009 = vshll.u32 683565275, %v1006
    %v1010 = vshrl.u32 2475754826, %v1007
    %v1011 = vor.u32 %v1009, %v1010
    %v1012 = vshll.u32 2475754826, %v1006
    %v1013 = vshrl.u32 2131351028, %v1007
    %v1014 = vor.u32 %v1012, %v1013
    %v1015 = vshll.u32 2131351028, %v1006
    %v1016 = vshrl.u32 2102212464, %v1007
    %v1017 = vor.u32 %v1015, %v1016
    %v1018 = vshll.u32 2102212464, %v1006
    %v1019 = vshrl.u32 920167782, %v1007
    %v1020 = vor.u32 %v1018, %v1019
    %v1021 = vshll.u32 920167782, %v1006
    %v1022 = vshrl.u32 1326507024, %v1007
    %v1023 = vor.u32 %v1021, %v1022
    %vm1024 = vcmp.lt.s32.totalorder %v1005, 1
    %vm1025 = vcmp.lt.s32.totalorder %v1005, 2
    %vm1026 = vcmp.lt.s32.totalorder %v1005, 3
    %vm1027 = vcmp.lt.s32.totalorder %v1005, 4
    %v1028 = vsel %vm1024, %v1008, %v1011
    %v1029 = vsel %vm1027, %v1017, 2102212464
    %v1030 = vsel %vm1026, %v1014, %v1029
    %v1031 = vsel %vm1025, %v1028, %v1030
    %v1032 = vsel %vm1024, %v1011, %v1014
    %v1033 = vsel %vm1027, %v1020, 920167782
    %v1034 = vsel %vm1026, %v1017, %v1033
    %v1035 = vsel %vm1025, %v1032, %v1034
    %v1036 = vsel %vm1024, %v1014, %v1017
    %v1037 = vsel %vm1027, %v1023, 1326507024
    %v1038 = vsel %vm1026, %v1020, %v1037
    %v1039 = vsel %vm1025, %v1036, %v1038
    %v1040 = vshll.u32 %v1000, 8
    %v1041 = vmul.u32.u64.compose %v1040, %v1039
    %v1042 = vextract.low.u32 %v1041
    %v1043 = vextract.high.u32 %v1041
    %v1044 = vmul.u32.u64.compose %v1040, %v1035
    %v1045 = vextract.low.u32 %v1044
    %v1046 = vextract.high.u32 %v1044
    %v1047 = vmul.u32 %v1040, %v1031
    %v1048 = vadd.s32 %v1043, %v1045
    %vm1049 = vc.u32 %v1043, %v1045
    %v1050 = vadd.s32 %v1046, 1
    %v1051 = vsel %vm1049, %v1050, %v1046
    %v1052 = vadd.s32 %v1047, %v1051
    %v1053 = vadd.s32 %v1052, 536870912
    %v1054 = vshrl.u32 %v1053, 30
    %v1055 = vshll.u32 %v1054, 30
    %v1056 = vsub.s32 %v1052, %v1055
    %vm1057 = vcmp.lt.s32.totalorder %v1056, 0
    %v1058 = vsub.s32 0, %v1056
    %v1059 = vsel %vm1057, %v1058, %v1056
    %v1060 = vclz %v1059
    %v1061 = vsub.s32 %v1060, 2
    %vm1062 = vcmp.gt.s32.totalorder 0, %v1061
    %v1063 = vsel %vm1062, 0, %v1061
    %v1064 = vsub.s32 32, %v1063
    %v1065 = vshll.u32 %v1056, %v1063
    %v1066 = vshrl.u32 %v1048, %v1064
    %v1067 = vor.u32 %v1065, %v1066
    %v1068 = vsub.s32 4294967266, %v1063
    %v1069 = vadd.s32 %v1068, 127
    %v1070 = vshll.u32 %v1069, 23
    %v1071 = vor.u32 4788187, %v1070
    %v1072 = vand.u32 2147483647, %v1071
    %v1074 = vcvt.s32.f32 %v1067
    %v1075 = vmul.f32 %v1074, %v1072
    %v1076 = vxor.u32 %v1075, 2147483648
    %v1077 = vsel %vm994, %v1076, %v1075
    %v1078 = vsub.s32 4, %v1054
    %v1079 = vsel %vm994, %v1078, %v1054
    %v1080 = vsel %vm993, %v675, %v1077
    %v1081 = vsel %vm993, 0, %v1079
    %v1082 = vcosq.f32.pop %v1080
    %v1083 = vsinq.f32.pop %v1080
    %vm1084 = vweird.f32 %v675
    %v1085 = vadd.s32 %v1081, 3
    %v1086 = vand.u32 %v1085, 3
    %vm1087 = vcmp.lt.s32.totalorder %v1086, 2
    %vm1088 = vcmp.eq.s32.totalorder %v1086, 0
    %v1089 = vxor.u32 %v1083, 2147483648
    %v1090 = vsel %vm1088, %v1082, %v1089
    %vm1091 = vcmp.eq.s32.totalorder %v1086, 2
    %v1092 = vxor.u32 %v1082, 2147483648
    %v1093 = vsel %vm1091, %v1092, %v1083
    %v1094 = vsel %vm1087, %v1090, %v1093
    %v1095 = vsel %vm1084, nan, %v1094
    %v1096 = vand.u32 2147483647, %v676
    %vm1097 = vcmp.le.f32.partialorder %v1096, 0.7853982
    %vm1098 = vcmp.lt.s32.totalorder %v676, 0
    %v1099 = vand.u32 %v676, 2139095040
    %v1100 = vshrl.u32 %v1099, 23
    %v1101 = vsub.s32 %v1100, 127
    %v1102 = vand.u32 2147483647, %v676
    %v1103 = vand.u32 %v1102, 8388607
    %v1104 = vor.u32 %v1103, 8388608
    %v1105 = vsub.s32 0, %v1104
    %v1106 = vadd.s32 %v1101, 1
    %vm1107 = vcmp.gt.s32.totalorder %v1106, 0
    %v1108 = vsel %vm1107, %v1106, 0
    %v1109 = vshrl.u32 %v1108, 5
    %v1110 = vand.u32 %v1108, 31
    %v1111 = vsub.s32 32, %v1110
    %v1112 = vshrl.u32 683565275, %v1111
    %v1113 = vshll.u32 683565275, %v1110
    %v1114 = vshrl.u32 2475754826, %v1111
    %v1115 = vor.u32 %v1113, %v1114
    %v1116 = vshll.u32 2475754826, %v1110
    %v1117 = vshrl.u32 2131351028, %v1111
    %v1118 = vor.u32 %v1116, %v1117
    %v1119 = vshll.u32 2131351028, %v1110
    %v1120 = vshrl.u32 2102212464, %v1111
    %v1121 = vor.u32 %v1119, %v1120
    %v1122 = vshll.u32 2102212464, %v1110
    %v1123 = vshrl.u32 920167782, %v1111
    %v1124 = vor.u32 %v1122, %v1123
    %v1125 = vshll.u32 920167782, %v1110
    %v1126 = vshrl.u32 1326507024, %v1111
    %v1127 = vor.u32 %v1125, %v1126
    %vm1128 = vcmp.lt.s32.totalorder %v1109, 1
    %vm1129 = vcmp.lt.s32.totalorder %v1109, 2
    %vm1130 = vcmp.lt.s32.totalorder %v1109, 3
    %vm1131 = vcmp.lt.s32.totalorder %v1109, 4
    %v1132 = vsel %vm1128, %v1112, %v1115
    %v1133 = vsel %vm1131, %v1121, 2102212464
    %v1134 = vsel %vm1130, %v1118, %v1133
    %v1135 = vsel %vm1129, %v1132, %v1134
    %v1136 = vsel %vm1128, %v1115, %v1118
    %v1137 = vsel %vm1131, %v1124, 920167782
    %v1138 = vsel %vm1130, %v1121, %v1137
    %v1139 = vsel %vm1129, %v1136, %v1138
    %v1140 = vsel %vm1128, %v1118, %v1121
    %v1141 = vsel %vm1131, %v1127, 1326507024
    %v1142 = vsel %vm1130, %v1124, %v1141
    %v1143 = vsel %vm1129, %v1140, %v1142
    %v1144 = vshll.u32 %v1104, 8
    %v1145 = vmul.u32.u64.compose %v1144, %v1143
    %v1146 = vextract.low.u32 %v1145
    %v1147 = vextract.high.u32 %v1145
    %v1148 = vmul.u32.u64.compose %v1144, %v1139
    %v1149 = vextract.low.u32 %v1148
    %v1150 = vextract.high.u32 %v1148
    %v1151 = vmul.u32 %v1144, %v1135
    %v1152 = vadd.s32 %v1147, %v1149
    %vm1153 = vc.u32 %v1147, %v1149
    %v1154 = vadd.s32 %v1150, 1
    %v1155 = vsel %vm1153, %v1154, %v1150
    %v1156 = vadd.s32 %v1151, %v1155
    %v1157 = vadd.s32 %v1156, 536870912
    %v1158 = vshrl.u32 %v1157, 30
    %v1159 = vshll.u32 %v1158, 30
    %v1160 = vsub.s32 %v1156, %v1159
    %vm1161 = vcmp.lt.s32.totalorder %v1160, 0
    %v1162 = vsub.s32 0, %v1160
    %v1163 = vsel %vm1161, %v1162, %v1160
    %v1164 = vclz %v1163
    %v1165 = vsub.s32 %v1164, 2
    %vm1166 = vcmp.gt.s32.totalorder 0, %v1165
    %v1167 = vsel %vm1166, 0, %v1165
    %v1168 = vsub.s32 32, %v1167
    %v1169 = vshll.u32 %v1160, %v1167
    %v1170 = vshrl.u32 %v1152, %v1168
    %v1171 = vor.u32 %v1169, %v1170
    %v1172 = vsub.s32 4294967266, %v1167
    %v1173 = vadd.s32 %v1172, 127
    %v1174 = vshll.u32 %v1173, 23
    %v1175 = vor.u32 4788187, %v1174
    %v1176 = vand.u32 2147483647, %v1175
    %v1178 = vcvt.s32.f32 %v1171
    %v1179 = vmul.f32 %v1178, %v1176
    %v1180 = vxor.u32 %v1179, 2147483648
    %v1181 = vsel %vm1098, %v1180, %v1179
    %v1182 = vsub.s32 4, %v1158
    %v1183 = vsel %vm1098, %v1182, %v1158
    %v1184 = vsel %vm1097, %v676, %v1181
    %v1185 = vsel %vm1097, 0, %v1183
    %v1186 = vcosq.f32.pop %v1184
    %v1187 = vsinq.f32.pop %v1184
    %vm1188 = vweird.f32 %v676
    %v1189 = vadd.s32 %v1185, 3
    %v1190 = vand.u32 %v1189, 3
    %vm1191 = vcmp.lt.s32.totalorder %v1190, 2
    %vm1192 = vcmp.eq.s32.totalorder %v1190, 0
    %v1193 = vxor.u32 %v1187, 2147483648
    %v1194 = vsel %vm1192, %v1186, %v1193
    %vm1195 = vcmp.eq.s32.totalorder %v1190, 2
    %v1196 = vxor.u32 %v1186, 2147483648
    %v1197 = vsel %vm1195, %v1196, %v1187
    %v1198 = vsel %vm1191, %v1194, %v1197
    %v1199 = vsel %vm1188, nan, %v1198
    %v1200 = vand.u32 2147483647, %v677
    %vm1201 = vcmp.le.f32.partialorder %v1200, 0.7853982
    %vm1202 = vcmp.lt.s32.totalorder %v677, 0
    %v1203 = vand.u32 %v677, 2139095040
    %v1204 = vshrl.u32 %v1203, 23
    %v1205 = vsub.s32 %v1204, 127
    %v1206 = vand.u32 2147483647, %v677
    %v1207 = vand.u32 %v1206, 8388607
    %v1208 = vor.u32 %v1207, 8388608
    %v1209 = vsub.s32 0, %v1208
    %v1210 = vadd.s32 %v1205, 1
    %vm1211 = vcmp.gt.s32.totalorder %v1210, 0
    %v1212 = vsel %vm1211, %v1210, 0
    %v1213 = vshrl.u32 %v1212, 5
    %v1214 = vand.u32 %v1212, 31
    %v1215 = vsub.s32 32, %v1214
    %v1216 = vshrl.u32 683565275, %v1215
    %v1217 = vshll.u32 683565275, %v1214
    %v1218 = vshrl.u32 2475754826, %v1215
    %v1219 = vor.u32 %v1217, %v1218
    %v1220 = vshll.u32 2475754826, %v1214
    %v1221 = vshrl.u32 2131351028, %v1215
    %v1222 = vor.u32 %v1220, %v1221
    %v1223 = vshll.u32 2131351028, %v1214
    %v1224 = vshrl.u32 2102212464, %v1215
    %v1225 = vor.u32 %v1223, %v1224
    %v1226 = vshll.u32 2102212464, %v1214
    %v1227 = vshrl.u32 920167782, %v1215
    %v1228 = vor.u32 %v1226, %v1227
    %v1229 = vshll.u32 920167782, %v1214
    %v1230 = vshrl.u32 1326507024, %v1215
    %v1231 = vor.u32 %v1229, %v1230
    %vm1232 = vcmp.lt.s32.totalorder %v1213, 1
    %vm1233 = vcmp.lt.s32.totalorder %v1213, 2
    %vm1234 = vcmp.lt.s32.totalorder %v1213, 3
    %vm1235 = vcmp.lt.s32.totalorder %v1213, 4
    %v1236 = vsel %vm1232, %v1216, %v1219
    %v1237 = vsel %vm1235, %v1225, 2102212464
    %v1238 = vsel %vm1234, %v1222, %v1237
    %v1239 = vsel %vm1233, %v1236, %v1238
    %v1240 = vsel %vm1232, %v1219, %v1222
    %v1241 = vsel %vm1235, %v1228, 920167782
    %v1242 = vsel %vm1234, %v1225, %v1241
    %v1243 = vsel %vm1233, %v1240, %v1242
    %v1244 = vsel %vm1232, %v1222, %v1225
    %v1245 = vsel %vm1235, %v1231, 1326507024
    %v1246 = vsel %vm1234, %v1228, %v1245
    %v1247 = vsel %vm1233, %v1244, %v1246
    %v1248 = vshll.u32 %v1208, 8
    %v1249 = vmul.u32.u64.compose %v1248, %v1247
    %v1250 = vextract.low.u32 %v1249
    %v1251 = vextract.high.u32 %v1249
    %v1252 = vmul.u32.u64.compose %v1248, %v1243
    %v1253 = vextract.low.u32 %v1252
    %v1254 = vextract.high.u32 %v1252
    %v1255 = vmul.u32 %v1248, %v1239
    %v1256 = vadd.s32 %v1251, %v1253
    %vm1257 = vc.u32 %v1251, %v1253
    %v1258 = vadd.s32 %v1254, 1
    %v1259 = vsel %vm1257, %v1258, %v1254
    %v1260 = vadd.s32 %v1255, %v1259
    %v1261 = vadd.s32 %v1260, 536870912
    %v1262 = vshrl.u32 %v1261, 30
    %v1263 = vshll.u32 %v1262, 30
    %v1264 = vsub.s32 %v1260, %v1263
    %vm1265 = vcmp.lt.s32.totalorder %v1264, 0
    %v1266 = vsub.s32 0, %v1264
    %v1267 = vsel %vm1265, %v1266, %v1264
    %v1268 = vclz %v1267
    %v1269 = vsub.s32 %v1268, 2
    %vm1270 = vcmp.gt.s32.totalorder 0, %v1269
    %v1271 = vsel %vm1270, 0, %v1269
    %v1272 = vsub.s32 32, %v1271
    %v1273 = vshll.u32 %v1264, %v1271
    %v1274 = vshrl.u32 %v1256, %v1272
    %v1275 = vor.u32 %v1273, %v1274
    %v1276 = vsub.s32 4294967266, %v1271
    %v1277 = vadd.s32 %v1276, 127
    %v1278 = vshll.u32 %v1277, 23
    %v1279 = vor.u32 4788187, %v1278
    %v1280 = vand.u32 2147483647, %v1279
    %v1282 = vcvt.s32.f32 %v1275
    %v1283 = vmul.f32 %v1282, %v1280
    %v1284 = vxor.u32 %v1283, 2147483648
    %v1285 = vsel %vm1202, %v1284, %v1283
    %v1286 = vsub.s32 4, %v1262
    %v1287 = vsel %vm1202, %v1286, %v1262
    %v1288 = vsel %vm1201, %v677, %v1285
    %v1289 = vsel %vm1201, 0, %v1287
    %v1290 = vcosq.f32.pop %v1288
    %v1291 = vsinq.f32.pop %v1288
    %vm1292 = vweird.f32 %v677
    %v1293 = vadd.s32 %v1289, 3
    %v1294 = vand.u32 %v1293, 3
    %vm1295 = vcmp.lt.s32.totalorder %v1294, 2
    %vm1296 = vcmp.eq.s32.totalorder %v1294, 0
    %v1297 = vxor.u32 %v1291, 2147483648
    %v1298 = vsel %vm1296, %v1290, %v1297
    %vm1299 = vcmp.eq.s32.totalorder %v1294, 2
    %v1300 = vxor.u32 %v1290, 2147483648
    %v1301 = vsel %vm1299, %v1300, %v1291
    %v1302 = vsel %vm1295, %v1298, %v1301
    %v1303 = vsel %vm1292, nan, %v1302
    %v1304 = vand.u32 2147483647, %v678
    %vm1305 = vcmp.le.f32.partialorder %v1304, 0.7853982
    %vm1306 = vcmp.lt.s32.totalorder %v678, 0
    %v1307 = vand.u32 %v678, 2139095040
    %v1308 = vshrl.u32 %v1307, 23
    %v1309 = vsub.s32 %v1308, 127
    %v1310 = vand.u32 2147483647, %v678
    %v1311 = vand.u32 %v1310, 8388607
    %v1312 = vor.u32 %v1311, 8388608
    %v1313 = vsub.s32 0, %v1312
    %v1314 = vadd.s32 %v1309, 1
    %vm1315 = vcmp.gt.s32.totalorder %v1314, 0
    %v1316 = vsel %vm1315, %v1314, 0
    %v1317 = vshrl.u32 %v1316, 5
    %v1318 = vand.u32 %v1316, 31
    %v1319 = vsub.s32 32, %v1318
    %v1320 = vshrl.u32 683565275, %v1319
    %v1321 = vshll.u32 683565275, %v1318
    %v1322 = vshrl.u32 2475754826, %v1319
    %v1323 = vor.u32 %v1321, %v1322
    %v1324 = vshll.u32 2475754826, %v1318
    %v1325 = vshrl.u32 2131351028, %v1319
    %v1326 = vor.u32 %v1324, %v1325
    %v1327 = vshll.u32 2131351028, %v1318
    %v1328 = vshrl.u32 2102212464, %v1319
    %v1329 = vor.u32 %v1327, %v1328
    %v1330 = vshll.u32 2102212464, %v1318
    %v1331 = vshrl.u32 920167782, %v1319
    %v1332 = vor.u32 %v1330, %v1331
    %v1333 = vshll.u32 920167782, %v1318
    %v1334 = vshrl.u32 1326507024, %v1319
    %v1335 = vor.u32 %v1333, %v1334
    %vm1336 = vcmp.lt.s32.totalorder %v1317, 1
    %vm1337 = vcmp.lt.s32.totalorder %v1317, 2
    %vm1338 = vcmp.lt.s32.totalorder %v1317, 3
    %vm1339 = vcmp.lt.s32.totalorder %v1317, 4
    %v1340 = vsel %vm1336, %v1320, %v1323
    %v1341 = vsel %vm1339, %v1329, 2102212464
    %v1342 = vsel %vm1338, %v1326, %v1341
    %v1343 = vsel %vm1337, %v1340, %v1342
    %v1344 = vsel %vm1336, %v1323, %v1326
    %v1345 = vsel %vm1339, %v1332, 920167782
    %v1346 = vsel %vm1338, %v1329, %v1345
    %v1347 = vsel %vm1337, %v1344, %v1346
    %v1348 = vsel %vm1336, %v1326, %v1329
    %v1349 = vsel %vm1339, %v1335, 1326507024
    %v1350 = vsel %vm1338, %v1332, %v1349
    %v1351 = vsel %vm1337, %v1348, %v1350
    %v1352 = vshll.u32 %v1312, 8
    %v1353 = vmul.u32.u64.compose %v1352, %v1351
    %v1354 = vextract.low.u32 %v1353
    %v1355 = vextract.high.u32 %v1353
    %v1356 = vmul.u32.u64.compose %v1352, %v1347
    %v1357 = vextract.low.u32 %v1356
    %v1358 = vextract.high.u32 %v1356
    %v1359 = vmul.u32 %v1352, %v1343
    %v1360 = vadd.s32 %v1355, %v1357
    %vm1361 = vc.u32 %v1355, %v1357
    %v1362 = vadd.s32 %v1358, 1
    %v1363 = vsel %vm1361, %v1362, %v1358
    %v1364 = vadd.s32 %v1359, %v1363
    %v1365 = vadd.s32 %v1364, 536870912
    %v1366 = vshrl.u32 %v1365, 30
    %v1367 = vshll.u32 %v1366, 30
    %v1368 = vsub.s32 %v1364, %v1367
    %vm1369 = vcmp.lt.s32.totalorder %v1368, 0
    %v1370 = vsub.s32 0, %v1368
    %v1371 = vsel %vm1369, %v1370, %v1368
    %v1372 = vclz %v1371
    %v1373 = vsub.s32 %v1372, 2
    %vm1374 = vcmp.gt.s32.totalorder 0, %v1373
    %v1375 = vsel %vm1374, 0, %v1373
    %v1376 = vsub.s32 32, %v1375
    %v1377 = vshll.u32 %v1368, %v1375
    %v1378 = vshrl.u32 %v1360, %v1376
    %v1379 = vor.u32 %v1377, %v1378
    %v1380 = vsub.s32 4294967266, %v1375
    %v1381 = vadd.s32 %v1380, 127
    %v1382 = vshll.u32 %v1381, 23
    %v1383 = vor.u32 4788187, %v1382
    %v1384 = vand.u32 2147483647, %v1383
    %v1386 = vcvt.s32.f32 %v1379
    %v1387 = vmul.f32 %v1386, %v1384
    %v1388 = vxor.u32 %v1387, 2147483648
    %v1389 = vsel %vm1306, %v1388, %v1387
    %v1390 = vsub.s32 4, %v1366
    %v1391 = vsel %vm1306, %v1390, %v1366
    %v1392 = vsel %vm1305, %v678, %v1389
    %v1393 = vsel %vm1305, 0, %v1391
    %v1394 = vcosq.f32.pop %v1392
    %v1395 = vsinq.f32.pop %v1392
    %vm1396 = vweird.f32 %v678
    %v1397 = vadd.s32 %v1393, 3
    %v1398 = vand.u32 %v1397, 3
    %vm1399 = vcmp.lt.s32.totalorder %v1398, 2
    %vm1400 = vcmp.eq.s32.totalorder %v1398, 0
    %v1401 = vxor.u32 %v1395, 2147483648
    %v1402 = vsel %vm1400, %v1394, %v1401
    %vm1403 = vcmp.eq.s32.totalorder %v1398, 2
    %v1404 = vxor.u32 %v1394, 2147483648
    %v1405 = vsel %vm1403, %v1404, %v1395
    %v1406 = vsel %vm1399, %v1402, %v1405
    %v1407 = vsel %vm1396, nan, %v1406
    %v1408 = vand.u32 2147483647, %v679
    %vm1409 = vcmp.le.f32.partialorder %v1408, 0.7853982
    %vm1410 = vcmp.lt.s32.totalorder %v679, 0
    %v1411 = vand.u32 %v679, 2139095040
    %v1412 = vshrl.u32 %v1411, 23
    %v1413 = vsub.s32 %v1412, 127
    %v1414 = vand.u32 2147483647, %v679
    %v1415 = vand.u32 %v1414, 8388607
    %v1416 = vor.u32 %v1415, 8388608
    %v1417 = vsub.s32 0, %v1416
    %v1418 = vadd.s32 %v1413, 1
    %vm1419 = vcmp.gt.s32.totalorder %v1418, 0
    %v1420 = vsel %vm1419, %v1418, 0
    %v1421 = vshrl.u32 %v1420, 5
    %v1422 = vand.u32 %v1420, 31
    %v1423 = vsub.s32 32, %v1422
    %v1424 = vshrl.u32 683565275, %v1423
    %v1425 = vshll.u32 683565275, %v1422
    %v1426 = vshrl.u32 2475754826, %v1423
    %v1427 = vor.u32 %v1425, %v1426
    %v1428 = vshll.u32 2475754826, %v1422
    %v1429 = vshrl.u32 2131351028, %v1423
    %v1430 = vor.u32 %v1428, %v1429
    %v1431 = vshll.u32 2131351028, %v1422
    %v1432 = vshrl.u32 2102212464, %v1423
    %v1433 = vor.u32 %v1431, %v1432
    %v1434 = vshll.u32 2102212464, %v1422
    %v1435 = vshrl.u32 920167782, %v1423
    %v1436 = vor.u32 %v1434, %v1435
    %v1437 = vshll.u32 920167782, %v1422
    %v1438 = vshrl.u32 1326507024, %v1423
    %v1439 = vor.u32 %v1437, %v1438
    %vm1440 = vcmp.lt.s32.totalorder %v1421, 1
    %vm1441 = vcmp.lt.s32.totalorder %v1421, 2
    %vm1442 = vcmp.lt.s32.totalorder %v1421, 3
    %vm1443 = vcmp.lt.s32.totalorder %v1421, 4
    %v1444 = vsel %vm1440, %v1424, %v1427
    %v1445 = vsel %vm1443, %v1433, 2102212464
    %v1446 = vsel %vm1442, %v1430, %v1445
    %v1447 = vsel %vm1441, %v1444, %v1446
    %v1448 = vsel %vm1440, %v1427, %v1430
    %v1449 = vsel %vm1443, %v1436, 920167782
    %v1450 = vsel %vm1442, %v1433, %v1449
    %v1451 = vsel %vm1441, %v1448, %v1450
    %v1452 = vsel %vm1440, %v1430, %v1433
    %v1453 = vsel %vm1443, %v1439, 1326507024
    %v1454 = vsel %vm1442, %v1436, %v1453
    %v1455 = vsel %vm1441, %v1452, %v1454
    %v1456 = vshll.u32 %v1416, 8
    %v1457 = vmul.u32.u64.compose %v1456, %v1455
    %v1458 = vextract.low.u32 %v1457
    %v1459 = vextract.high.u32 %v1457
    %v1460 = vmul.u32.u64.compose %v1456, %v1451
    %v1461 = vextract.low.u32 %v1460
    %v1462 = vextract.high.u32 %v1460
    %v1463 = vmul.u32 %v1456, %v1447
    %v1464 = vadd.s32 %v1459, %v1461
    %vm1465 = vc.u32 %v1459, %v1461
    %v1466 = vadd.s32 %v1462, 1
    %v1467 = vsel %vm1465, %v1466, %v1462
    %v1468 = vadd.s32 %v1463, %v1467
    %v1469 = vadd.s32 %v1468, 536870912
    %v1470 = vshrl.u32 %v1469, 30
    %v1471 = vshll.u32 %v1470, 30
    %v1472 = vsub.s32 %v1468, %v1471
    %vm1473 = vcmp.lt.s32.totalorder %v1472, 0
    %v1474 = vsub.s32 0, %v1472
    %v1475 = vsel %vm1473, %v1474, %v1472
    %v1476 = vclz %v1475
    %v1477 = vsub.s32 %v1476, 2
    %vm1478 = vcmp.gt.s32.totalorder 0, %v1477
    %v1479 = vsel %vm1478, 0, %v1477
    %v1480 = vsub.s32 32, %v1479
    %v1481 = vshll.u32 %v1472, %v1479
    %v1482 = vshrl.u32 %v1464, %v1480
    %v1483 = vor.u32 %v1481, %v1482
    %v1484 = vsub.s32 4294967266, %v1479
    %v1485 = vadd.s32 %v1484, 127
    %v1486 = vshll.u32 %v1485, 23
    %v1487 = vor.u32 4788187, %v1486
    %v1488 = vand.u32 2147483647, %v1487
    %v1490 = vcvt.s32.f32 %v1483
    %v1491 = vmul.f32 %v1490, %v1488
    %v1492 = vxor.u32 %v1491, 2147483648
    %v1493 = vsel %vm1410, %v1492, %v1491
    %v1494 = vsub.s32 4, %v1470
    %v1495 = vsel %vm1410, %v1494, %v1470
    %v1496 = vsel %vm1409, %v679, %v1493
    %v1497 = vsel %vm1409, 0, %v1495
    %v1498 = vcosq.f32.pop %v1496
    %v1499 = vsinq.f32.pop %v1496
    %vm1500 = vweird.f32 %v679
    %v1501 = vadd.s32 %v1497, 3
    %v1502 = vand.u32 %v1501, 3
    %vm1503 = vcmp.lt.s32.totalorder %v1502, 2
    %vm1504 = vcmp.eq.s32.totalorder %v1502, 0
    %v1505 = vxor.u32 %v1499, 2147483648
    %v1506 = vsel %vm1504, %v1498, %v1505
    %vm1507 = vcmp.eq.s32.totalorder %v1502, 2
    %v1508 = vxor.u32 %v1498, 2147483648
    %v1509 = vsel %vm1507, %v1508, %v1499
    %v1510 = vsel %vm1503, %v1506, %v1509
    %v1511 = vsel %vm1500, nan, %v1510
    %v1512 = vmul.f32 %v783, %v568
    %v1513 = vmul.f32 %v887, %v570
    %v1514 = vmul.f32 %v991, %v611
    %v1515 = vmul.f32 %v1095, %v613
    %v1516 = vmul.f32 %v1199, %v572
    %v1517 = vmul.f32 %v1303, %v574
    %v1518 = vmul.f32 %v1407, %v615
    %v1519 = vmul.f32 %v1511, %v617
    %1520 = vst [vmem:[#allocation8] sm:$0xff] %v1512
    %1521 = vst [vmem:[#allocation8 + $0x8] sm:$0xff] %v1513
    %1522 = vst [vmem:[#allocation8 + $0x10] sm:$0xff] %v1514
    %1523 = vst [vmem:[#allocation8 + $0x18] sm:$0xff] %v1515
    %1524 = vst [vmem:[#allocation8 + $0x20] sm:$0xff] %v1516
    %1525 = vst [vmem:[#allocation8 + $0x28] sm:$0xff] %v1517
    %1526 = vst [vmem:[#allocation8 + $0x30] sm:$0xff] %v1518
    %1527 = vst [vmem:[#allocation8 + $0x38] sm:$0xff] %v1519
    // Predicated region
    $region26: #{tpu_custom_call.1} parent=1 // pred_check
      _
    $region27: #{tpu_custom_call.1} parent=1 // pred_check_branch
      %1529 = sbr.rel (0) target = $region29
    $region28: #{tpu_custom_call.1} parent=1 // pred_region
      %s1531 = ssub.s32 1024, 1024
      %1532 = vsyncadd [#allocation4], %s1531
      %s1533 = sshll.u32 [#allocation8], 4
      %s1534 = int_to_ptr.vmem [resolvable:$true] %s1533
      %1539 = dma.vmem_to_hbm [thread:$0]  %s1534, 1024, %s3, [#allocation4], 512, 512, 32
    $region29: #{tpu_custom_call.1} parent=1 // pred_fallthru
      _
    // Predicated region
    $region30: #{tpu_custom_call.1} parent=1 // pred_check
      _
    $region31: #{tpu_custom_call.1} parent=1 // pred_check_branch
      %1541 = sbr.rel (0) target = $region33
    $region32: #{tpu_custom_call.1} parent=1 // pred_region
      %1542 = dma.done [#allocation4], 1024
    $region33: #{tpu_custom_call.1} parent=1 // pred_fallthru
      _
    %1543 = vsyncpa [#allocation3], 1
    %1544 = vsyncpa [#allocation6], 1
    %1545 = vsyncpa [#allocation4], 1

</llo_original>
